<compile_context>
chip_gen: v6e
topology: v6e:2x2x1
jax: 0.10.0
libtpu: 0.0.40
codegen_flags: <defaults>
</compile_context>

<pallas_src>
import functools

import jax
import jax.numpy as jnp
from jax.experimental import pallas as pl
from jax.experimental.pallas import tpu as pltpu


def _round_up(x: int, m: int) -> int:
    return (x + m - 1) // m * m


def _seq_cnn_kernel(x_ref, w_ref, b_ref, o_ref, xpad_ref, *,
                    kernel_size: int, pad_left: int):
    """One batch tile per grid step.

    x_ref:    (TB, L, C_in)          un-padded sequences (NLC layout)
    w_ref:    (K*C_in, C_out_pad)    folded conv weights (torch cross-correlation)
    b_ref:    (1, C_out_pad)         bias (zero in padded channels)
    o_ref:    (TB, C_out_pad)        pooled output (lane-dense)
    xpad_ref: (TB, L + K - 1, C_in)  VMEM scratch holding the 'same'-padded tile
    """
    tb, L, c_in = x_ref.shape
    K = kernel_size

    # Zero the halo rows once; the interior is overwritten every grid step.
    @pl.when(pl.program_id(0) == 0)
    def _():
        xpad_ref[...] = jnp.zeros_like(xpad_ref)

    xpad_ref[:, pad_left:pad_left + L, :] = x_ref[...]

    # Fold the K taps into the contraction axis: (TB, L, K*C_in).
    x_cat = jnp.concatenate([xpad_ref[:, k:k + L, :] for k in range(K)], axis=-1)
    x_2d = x_cat.reshape(tb * L, K * c_in)

    # Single MXU matmul for the whole tile, then bias + ReLU on the VPU.
    y = jnp.dot(x_2d, w_ref[...], preferred_element_type=jnp.float32)
    y = jnp.maximum(y + b_ref[...], 0.0)

    # Global max pool over the length axis -> (TB, C_out_pad).
    o_ref[...] = jnp.max(y.reshape(tb, L, -1), axis=1)


def sequence_cnn_forward_nlc(x_nlc, weight, bias, *, batch_tile=None):
    """Core fast path.  x_nlc: (B, L, C_in); weight: (C_out, C_in, K); bias: (C_out,)."""
    B, L, C_in = x_nlc.shape
    C_out, _, K = weight.shape

    pad_total = K - 1
    pad_left = pad_total // 2        # torch padding='same' convention (odd K symmetric)

    # Fold weights: w2[k*C_in + i, o] = weight[o, i, k]; pad C_out to lane width (128).
    c_out_pad = _round_up(C_out, 128)
    w2 = jnp.transpose(weight, (2, 1, 0)).reshape(K * C_in, C_out).astype(jnp.float32)
    w2 = jnp.pad(w2, ((0, 0), (0, c_out_pad - C_out)))
    b2 = jnp.pad(bias.astype(jnp.float32), (0, c_out_pad - C_out)).reshape(1, c_out_pad)

    # Batch tile: multiple of 8 sublanes, capped at 128 rows per grid step.
    if batch_tile is None:
        batch_tile = min(128, _round_up(B, 8))
    tb = batch_tile
    b_pad = _round_up(B, tb)
    x = x_nlc.astype(jnp.float32)
    if b_pad != B:
        x = jnp.pad(x, ((0, b_pad - B), (0, 0), (0, 0)))

    kernel = functools.partial(_seq_cnn_kernel, kernel_size=K, pad_left=pad_left)

    out = pl.pallas_call(
        kernel,
        out_shape=jax.ShapeDtypeStruct((b_pad, c_out_pad), jnp.float32),
        grid_spec=pltpu.PrefetchScalarGridSpec(
            num_scalar_prefetch=0,
            grid=(b_pad // tb,),
            in_specs=[
                pl.BlockSpec((tb, L, C_in), lambda b: (b, 0, 0)),
                pl.BlockSpec((K * C_in, c_out_pad), lambda b: (0, 0)),
                pl.BlockSpec((1, c_out_pad), lambda b: (0, 0)),
            ],
            out_specs=pl.BlockSpec((tb, c_out_pad), lambda b: (b, 0)),
            scratch_shapes=[pltpu.VMEM((tb, L + pad_total, C_in), jnp.float32)],
        ),
        compiler_params=pltpu.CompilerParams(
            dimension_semantics=("parallel",)),
    )(x, w2, b2)

    return out[:B, :C_out]


def sequence_cnn_forward(x_ncl, weight, bias, *, kernel_size: int = 3, batch_tile=None):
    """Torch-compatible entry point: x_ncl (B, C_in, L) -> (B, C_out), like
    SequenceCNN.forward (conv1d 'same' + ReLU + AdaptiveMaxPool1d(1) + squeeze)."""
    assert weight.shape[-1] == kernel_size
    # NCL -> NLC so channels sit on the lane axis.  This is the only wrapper-side
    # HBM copy; feed NLC data to sequence_cnn_forward_nlc to avoid it entirely.
    x_nlc = jnp.transpose(x_ncl, (0, 2, 1))
    return sequence_cnn_forward_nlc(x_nlc, weight, bias, batch_tile=batch_tile)


def _reference_forward(x_ncl, weight, bias):
    """Pure-JAX reference (lax conv) for a sanity check."""
    y = jax.lax.conv_general_dilated(
        x_ncl, weight,
        window_strides=(1,),
        padding="SAME",
        dimension_numbers=("NCH", "OIH", "NCH"),
    ) + bias[None, :, None]
    y = jnp.maximum(y, 0.0)
    return jnp.max(y, axis=-1)


if __name__ == "__main__":
    # Small shapes consistent with the module: batch=2, in_channels=4,
    # seq_len=16, out_channels=8, kernel_size=3.
    B, C_IN, L, C_OUT, K = 2, 4, 16, 8, 3

    key = jax.random.PRNGKey(0)
    kx, kw, kb = jax.random.split(key, 3)

    x = jax.random.normal(kx, (B, C_IN, L), dtype=jnp.float32)
    # Deterministic init mimicking torch's uniform(-1/sqrt(fan_in), 1/sqrt(fan_in)).
    bound = 1.0 / jnp.sqrt(jnp.float32(C_IN * K))
    weight = jax.random.uniform(kw, (C_OUT, C_IN, K), jnp.float32, -bound, bound)
    bias = jax.random.uniform(kb, (C_OUT,), jnp.float32, -bound, bound)

    out = jax.block_until_ready(sequence_cnn_forward(x, weight, bias, kernel_size=K))
    ref = jax.block_until_ready(_reference_forward(x, weight, bias))

    assert out.shape == (B, C_OUT)
    assert jnp.allclose(out, ref, atol=1e-5, rtol=1e-5), "mismatch vs reference"

    print("KERNEL_OK")
</pallas_src>

<mosaic_0001>
module attributes {stable_mosaic.version = 11 : i64} {
  func.func @_seq_cnn_kernel(%arg0: i32, %arg1: memref<8x16x4xf32, #tpu.memory_space<vmem>>, %arg2: memref<12x128xf32, #tpu.memory_space<vmem>>, %arg3: memref<1x128xf32, #tpu.memory_space<vmem>>, %arg4: memref<8x128xf32, #tpu.memory_space<vmem>>, %arg5: memref<8x18x4xf32, #tpu.memory_space<vmem>>) attributes {dimension_semantics = [#tpu.dimension_semantics<parallel>], iteration_bounds = array<i64: 1>, scalar_prefetch = 0 : i64, scratch_operands = 1 : i64, tpu.core_type = #tpu.core_type<tc>, window_params = [{transform_indices = @transform_0, window_bounds = array<i64: 8, 16, 4>}, {pipeline_mode = #tpu.pipeline_mode<synchronous>, transform_indices = @transform_1, window_bounds = array<i64: 12, 128>}, {pipeline_mode = #tpu.pipeline_mode<synchronous>, transform_indices = @transform_2, window_bounds = array<i64: 1, 128>}, {transform_indices = @transform_3, window_bounds = array<i64: 8, 128>}]} {
    %c0_i32 = arith.constant 0 : i32
    %0 = arith.cmpi eq, %arg0, %c0_i32 : i32
    %1 = arith.extui %0 : i1 to i32
    %c0_i32_0 = arith.constant 0 : i32
    %2 = arith.cmpi ne, %1, %c0_i32_0 : i32
    scf.if %2 {
      %cst_21 = arith.constant 0.000000e+00 : f32
      %20 = vector.broadcast %cst_21 : f32 to vector<8x18x4xf32>
      %c0_22 = arith.constant 0 : index
      %c0_23 = arith.constant 0 : index
      %c0_24 = arith.constant 0 : index
      %21 = vector.load %arg5[%c0_22, %c0_23, %c0_24] : memref<8x18x4xf32, #tpu.memory_space<vmem>>, vector<8x18x4xf32>
      tpu.vector_store %arg5[%c0_22, %c0_23, %c0_24], %20 {strides = array<i32>} : memref<8x18x4xf32, #tpu.memory_space<vmem>>, vector<8x18x4xf32>,
    } else {
    }
    %c0 = arith.constant 0 : index
    %c0_1 = arith.constant 0 : index
    %c0_2 = arith.constant 0 : index
    %3 = vector.load %arg1[%c0, %c0_1, %c0_2] : memref<8x16x4xf32, #tpu.memory_space<vmem>>, vector<8x16x4xf32>
    %c0_3 = arith.constant 0 : index
    %c1 = arith.constant 1 : index
    %c0_4 = arith.constant 0 : index
    %4 = vector.load %arg5[%c0_3, %c1, %c0_4] : memref<8x18x4xf32, #tpu.memory_space<vmem>>, vector<8x16x4xf32>
    tpu.vector_store %arg5[%c0_3, %c1, %c0_4], %3 {strides = array<i32>} : memref<8x18x4xf32, #tpu.memory_space<vmem>>, vector<8x16x4xf32>,
    %c0_5 = arith.constant 0 : index
    %c0_6 = arith.constant 0 : index
    %c0_7 = arith.constant 0 : index
    %5 = vector.load %arg5[%c0_5, %c0_6, %c0_7] : memref<8x18x4xf32, #tpu.memory_space<vmem>>, vector<8x16x4xf32>
    %c0_8 = arith.constant 0 : index
    %c1_9 = arith.constant 1 : index
    %c0_10 = arith.constant 0 : index
    %6 = vector.load %arg5[%c0_8, %c1_9, %c0_10] : memref<8x18x4xf32, #tpu.memory_space<vmem>>, vector<8x16x4xf32>
    %c0_11 = arith.constant 0 : index
    %c2 = arith.constant 2 : index
    %c0_12 = arith.constant 0 : index
    %7 = vector.load %arg5[%c0_11, %c2, %c0_12] : memref<8x18x4xf32, #tpu.memory_space<vmem>>, vector<8x16x4xf32>
    %8 = tpu.concatenate %5, %6, %7 in 2 : vector<8x16x4xf32>, vector<8x16x4xf32>, vector<8x16x4xf32> -> vector<8x16x12xf32>
    %9 = vector.shape_cast %8 : vector<8x16x12xf32> to vector<128x12xf32>
    %c0_13 = arith.constant 0 : index
    %c0_14 = arith.constant 0 : index
    %10 = vector.load %arg2[%c0_13, %c0_14] : memref<12x128xf32, #tpu.memory_space<vmem>>, vector<12x128xf32>
    %cst = arith.constant dense<0.000000e+00> : vector<128x128xf32>
    %11 = tpu.matmul %9, %10, %cst {dimension_numbers = #tpu.dot_dimension_numbers<[1], [0], [0], [1], [0, 0, 1, 1], [], []>} : vector<128x12xf32>, vector<12x128xf32>, vector<128x128xf32> -> vector<128x128xf32>
    %c0_15 = arith.constant 0 : index
    %c0_16 = arith.constant 0 : index
    %12 = vector.load %arg3[%c0_15, %c0_16] : memref<1x128xf32, #tpu.memory_space<vmem>>, vector<1x128xf32>
    %13 = vector.broadcast %12 : vector<1x128xf32> to vector<128x128xf32>
    %14 = arith.addf %11, %13 : vector<128x128xf32>
    %cst_17 = arith.constant 0.000000e+00 : f32
    %15 = vector.broadcast %cst_17 : f32 to vector<128x128xf32>
    %16 = arith.maximumf %14, %15 : vector<128x128xf32>
    %17 = vector.shape_cast %16 : vector<128x128xf32> to vector<8x16x128xf32>
    %cst_18 = arith.constant dense<0xFF800000> : vector<8x128xf32>
    %18 = vector.multi_reduction <maximumf>, %17, %cst_18 [1] : vector<8x16x128xf32> to vector<8x128xf32>
    %c0_19 = arith.constant 0 : index
    %c0_20 = arith.constant 0 : index
    %19 = vector.load %arg4[%c0_19, %c0_20] : memref<8x128xf32, #tpu.memory_space<vmem>>, vector<8x128xf32>
    tpu.vector_store %arg4[%c0_19, %c0_20], %18 {strides = array<i32>} : memref<8x128xf32, #tpu.memory_space<vmem>>, vector<8x128xf32>,
    return
  }
  func.func @transform_0(%arg0: i32) -> (i32, i32, i32) {
    %c0_i32 = arith.constant 0 : i32
    %c0_i32_0 = arith.constant 0 : i32
    %c0_i32_1 = arith.constant 0 : i32
    return %arg0, %c0_i32, %c0_i32_0 : i32, i32, i32
  }
  func.func @transform_1(%arg0: i32) -> (i32, i32) {
    %c0_i32 = arith.constant 0 : i32
    %c0_i32_0 = arith.constant 0 : i32
    %c0_i32_1 = arith.constant 0 : i32
    return %c0_i32, %c0_i32_0 : i32, i32
  }
  func.func @transform_2(%arg0: i32) -> (i32, i32) {
    %c0_i32 = arith.constant 0 : i32
    %c0_i32_0 = arith.constant 0 : i32
    %c0_i32_1 = arith.constant 0 : i32
    return %c0_i32, %c0_i32_0 : i32, i32
  }
  func.func @transform_3(%arg0: i32) -> (i32, i32) {
    %c0_i32 = arith.constant 0 : i32
    %c0_i32_0 = arith.constant 0 : i32
    return %arg0, %c0_i32 : i32, i32
  }
}

</mosaic_0001>

<llo_original>
// kernel: tpu_custom_call.1
$region0: #{tpu_custom_call.1}
  #allocation0 [shape = 'u32[]', space=smem, size = 0x4, offset = 0x4, fixed_abs, tag = 'smem constant byte address 0x4 - core index']
  #allocation1 [shape = 'u32[144,128]{1,0:T(1,128)}', space=vmem, size = 0x12000, scoped, tag = 'internal scratch']
  #allocation2 [shape = 'f32[8,18,4]{2,1,0:T(8,128)}', space=vmem, size = 0x18000, scoped, tag = 'scratch operand']
  %s0 = inlined_call_operand.vmem [shape: f32[8,16,4], index: 0, kind: input, shape index: {}]
  %s1 = inlined_call_operand.vmem [shape: f32[12,128], index: 1, kind: input, shape index: {}]
  %s2 = inlined_call_operand.vmem [shape: f32[1,128], index: 2, kind: input, shape index: {}]
  %s3 = inlined_call_operand.hbm [shape: f32[8,128], index: 3, kind: output, shape index: {}]
  %s4 = sld [smem:[#allocation0]]
  $region26: #{tpu_custom_call.1} parent=0
    _
  %s6 = ssub.s32 1, %s4
  %s7 = scalar_select 0, %s6, %s4
  $region1: #{tpu_custom_call.1} parent=0
    #allocation3 [shape = 'u8[4096]{0}', space=vmem, size = 0x1000, scoped, tag = 'output window, operand 0, single buffered']
    #allocation4 [shape = 's32[1]{0}', space=sflag, size = 0x4, scoped, tag = 'scoped memory for tpu_custom_call.1']
    %8 = vsyncpa [#allocation4], 0
    // Predicated region
    $region2: #{tpu_custom_call.1} parent=1 // pred_check
      _
    $region3: #{tpu_custom_call.1} parent=1 // pred_check_branch
      %10 = sbr.rel (0) target = $region5
    $region4: #{tpu_custom_call.1} parent=1 // pred_region
      _
    $region5: #{tpu_custom_call.1} parent=1 // pred_fallthru
      _
    // Predicated region
    $region6: #{tpu_custom_call.1} parent=1 // pred_check
      _
    $region7: #{tpu_custom_call.1} parent=1 // pred_check_branch
      %12 = sbr.rel (0) target = $region9
    $region8: #{tpu_custom_call.1} parent=1 // pred_region
      _
    $region9: #{tpu_custom_call.1} parent=1 // pred_fallthru
      _
    // Predicated region
    $region10: #{tpu_custom_call.1} parent=1 // pred_check
      _
    $region11: #{tpu_custom_call.1} parent=1 // pred_check_branch
      %14 = sbr.rel (0) target = $region13
    $region12: #{tpu_custom_call.1} parent=1 // pred_region
      _
    $region13: #{tpu_custom_call.1} parent=1 // pred_fallthru
      _
    %p15 = scmp.eq.s32.totalorder 0, 0
    // Predicated region
    $region14: #{tpu_custom_call.1} parent=1 // pred_check
      %p16 = pneg %p15
    $region15: #{tpu_custom_call.1} parent=1 // pred_check_branch
      %18 = sbr.rel (%p16) target = $region17
    $region16: #{tpu_custom_call.1} parent=1 // pred_region
      %vm19 = vcmask 31744
      %20 = vst.msk [vmem:[#allocation2] sm:$0xff] %vm19, 0.0
      %21 = vst.msk [vmem:[#allocation2 + $0x8] sm:$0xff] %vm19, 0.0
      %vm22 = vcmask 25600
      %23 = vst.msk [vmem:[#allocation2 + $0x10] sm:$0x3] %vm22, 0.0
      %24 = vst.msk [vmem:[#allocation2 + $0x18] sm:$0xff] %vm19, 0.0
      %25 = vst.msk [vmem:[#allocation2 + $0x20] sm:$0xff] %vm19, 0.0
      %26 = vst.msk [vmem:[#allocation2 + $0x28] sm:$0x3] %vm22, 0.0
      %27 = vst.msk [vmem:[#allocation2 + $0x30] sm:$0xff] %vm19, 0.0
      %28 = vst.msk [vmem:[#allocation2 + $0x38] sm:$0xff] %vm19, 0.0
      %29 = vst.msk [vmem:[#allocation2 + $0x40] sm:$0x3] %vm22, 0.0
      %30 = vst.msk [vmem:[#allocation2 + $0x48] sm:$0xff] %vm19, 0.0
      %31 = vst.msk [vmem:[#allocation2 + $0x50] sm:$0xff] %vm19, 0.0
      %32 = vst.msk [vmem:[#allocation2 + $0x58] sm:$0x3] %vm22, 0.0
      %33 = vst.msk [vmem:[#allocation2 + $0x60] sm:$0xff] %vm19, 0.0
      %34 = vst.msk [vmem:[#allocation2 + $0x68] sm:$0xff] %vm19, 0.0
      %35 = vst.msk [vmem:[#allocation2 + $0x70] sm:$0x3] %vm22, 0.0
      %36 = vst.msk [vmem:[#allocation2 + $0x78] sm:$0xff] %vm19, 0.0
      %37 = vst.msk [vmem:[#allocation2 + $0x80] sm:$0xff] %vm19, 0.0
      %38 = vst.msk [vmem:[#allocation2 + $0x88] sm:$0x3] %vm22, 0.0
      %39 = vst.msk [vmem:[#allocation2 + $0x90] sm:$0xff] %vm19, 0.0
      %40 = vst.msk [vmem:[#allocation2 + $0x98] sm:$0xff] %vm19, 0.0
      %41 = vst.msk [vmem:[#allocation2 + $0xa0] sm:$0x3] %vm22, 0.0
      %42 = vst.msk [vmem:[#allocation2 + $0xa8] sm:$0xff] %vm19, 0.0
      %43 = vst.msk [vmem:[#allocation2 + $0xb0] sm:$0xff] %vm19, 0.0
      %44 = vst.msk [vmem:[#allocation2 + $0xb8] sm:$0x3] %vm22, 0.0
    $region17: #{tpu_custom_call.1} parent=1 // pred_fallthru
      _
    %v45 = vld [vmem:[%s0] sm:$0xff]
    %v46 = vld [vmem:[%s0 + $0x8] sm:$0xff]
    %v47 = vld [vmem:[%s0 + $0x10] sm:$0xff]
    %v48 = vld [vmem:[%s0 + $0x18] sm:$0xff]
    %v49 = vld [vmem:[%s0 + $0x20] sm:$0xff]
    %v50 = vld [vmem:[%s0 + $0x28] sm:$0xff]
    %v51 = vld [vmem:[%s0 + $0x30] sm:$0xff]
    %v52 = vld [vmem:[%s0 + $0x38] sm:$0xff]
    %v53 = vld [vmem:[%s0 + $0x40] sm:$0xff]
    %v54 = vld [vmem:[%s0 + $0x48] sm:$0xff]
    %v55 = vld [vmem:[%s0 + $0x50] sm:$0xff]
    %v56 = vld [vmem:[%s0 + $0x58] sm:$0xff]
    %v57 = vld [vmem:[%s0 + $0x60] sm:$0xff]
    %v58 = vld [vmem:[%s0 + $0x68] sm:$0xff]
    %v59 = vld [vmem:[%s0 + $0x70] sm:$0xff]
    %v60 = vld [vmem:[%s0 + $0x78] sm:$0xff]
    %vm61 = vcmask 31744
    %62 = vst.msk [vmem:[#allocation2 + $0x1] sm:$0xff] %vm61, %v45
    %63 = vst.msk [vmem:[#allocation2 + $0x9] sm:$0xff] %vm61, %v46
    %64 = vst.msk [vmem:[#allocation2 + $0x19] sm:$0xff] %vm61, %v47
    %65 = vst.msk [vmem:[#allocation2 + $0x21] sm:$0xff] %vm61, %v48
    %66 = vst.msk [vmem:[#allocation2 + $0x31] sm:$0xff] %vm61, %v49
    %67 = vst.msk [vmem:[#allocation2 + $0x39] sm:$0xff] %vm61, %v50
    %68 = vst.msk [vmem:[#allocation2 + $0x49] sm:$0xff] %vm61, %v51
    %69 = vst.msk [vmem:[#allocation2 + $0x51] sm:$0xff] %vm61, %v52
    %70 = vst.msk [vmem:[#allocation2 + $0x61] sm:$0xff] %vm61, %v53
    %71 = vst.msk [vmem:[#allocation2 + $0x69] sm:$0xff] %vm61, %v54
    %72 = vst.msk [vmem:[#allocation2 + $0x79] sm:$0xff] %vm61, %v55
    %73 = vst.msk [vmem:[#allocation2 + $0x81] sm:$0xff] %vm61, %v56
    %74 = vst.msk [vmem:[#allocation2 + $0x91] sm:$0xff] %vm61, %v57
    %75 = vst.msk [vmem:[#allocation2 + $0x99] sm:$0xff] %vm61, %v58
    %76 = vst.msk [vmem:[#allocation2 + $0xa9] sm:$0xff] %vm61, %v59
    %77 = vst.msk [vmem:[#allocation2 + $0xb1] sm:$0xff] %vm61, %v60
    %v78 = vld [vmem:[#allocation2] sm:$0xff]
    %v79 = vld [vmem:[#allocation2 + $0x8] sm:$0xff]
    %v80 = vld [vmem:[#allocation2 + $0x18] sm:$0xff]
    %v81 = vld [vmem:[#allocation2 + $0x20] sm:$0xff]
    %v82 = vld [vmem:[#allocation2 + $0x30] sm:$0xff]
    %v83 = vld [vmem:[#allocation2 + $0x38] sm:$0xff]
    %v84 = vld [vmem:[#allocation2 + $0x48] sm:$0xff]
    %v85 = vld [vmem:[#allocation2 + $0x50] sm:$0xff]
    %v86 = vld [vmem:[#allocation2 + $0x60] sm:$0xff]
    %v87 = vld [vmem:[#allocation2 + $0x68] sm:$0xff]
    %v88 = vld [vmem:[#allocation2 + $0x78] sm:$0xff]
    %v89 = vld [vmem:[#allocation2 + $0x80] sm:$0xff]
    %v90 = vld [vmem:[#allocation2 + $0x90] sm:$0xff]
    %v91 = vld [vmem:[#allocation2 + $0x98] sm:$0xff]
    %v92 = vld [vmem:[#allocation2 + $0xa8] sm:$0xff]
    %v93 = vld [vmem:[#allocation2 + $0xb0] sm:$0xff]
    %v94 = vld [vmem:[#allocation2 + $0x1] sm:$0xff]
    %v95 = vld [vmem:[#allocation2 + $0x9] sm:$0xff]
    %v96 = vld [vmem:[#allocation2 + $0x19] sm:$0xff]
    %v97 = vld [vmem:[#allocation2 + $0x21] sm:$0xff]
    %v98 = vld [vmem:[#allocation2 + $0x31] sm:$0xff]
    %v99 = vld [vmem:[#allocation2 + $0x39] sm:$0xff]
    %v100 = vld [vmem:[#allocation2 + $0x49] sm:$0xff]
    %v101 = vld [vmem:[#allocation2 + $0x51] sm:$0xff]
    %v102 = vld [vmem:[#allocation2 + $0x61] sm:$0xff]
    %v103 = vld [vmem:[#allocation2 + $0x69] sm:$0xff]
    %v104 = vld [vmem:[#allocation2 + $0x79] sm:$0xff]
    %v105 = vld [vmem:[#allocation2 + $0x81] sm:$0xff]
    %v106 = vld [vmem:[#allocation2 + $0x91] sm:$0xff]
    %v107 = vld [vmem:[#allocation2 + $0x99] sm:$0xff]
    %v108 = vld [vmem:[#allocation2 + $0xa9] sm:$0xff]
    %v109 = vld [vmem:[#allocation2 + $0xb1] sm:$0xff]
    %v110 = vld [vmem:[#allocation2 + $0x2] sm:$0xff]
    %v111 = vld [vmem:[#allocation2 + $0xa] sm:$0xff]
    %v112 = vld [vmem:[#allocation2 + $0x1a] sm:$0xff]
    %v113 = vld [vmem:[#allocation2 + $0x22] sm:$0xff]
    %v114 = vld [vmem:[#allocation2 + $0x32] sm:$0xff]
    %v115 = vld [vmem:[#allocation2 + $0x3a] sm:$0xff]
    %v116 = vld [vmem:[#allocation2 + $0x4a] sm:$0xff]
    %v117 = vld [vmem:[#allocation2 + $0x52] sm:$0xff]
    %v118 = vld [vmem:[#allocation2 + $0x62] sm:$0xff]
    %v119 = vld [vmem:[#allocation2 + $0x6a] sm:$0xff]
    %v120 = vld [vmem:[#allocation2 + $0x7a] sm:$0xff]
    %v121 = vld [vmem:[#allocation2 + $0x82] sm:$0xff]
    %v122 = vld [vmem:[#allocation2 + $0x92] sm:$0xff]
    %v123 = vld [vmem:[#allocation2 + $0x9a] sm:$0xff]
    %v124 = vld [vmem:[#allocation2 + $0xaa] sm:$0xff]
    %v125 = vld [vmem:[#allocation2 + $0xb2] sm:$0xff]
    %142 = vrot.lane.b32.xlu0 %v94, 4
    %v143 = vpop.permute.xlu0 %142
    %144 = vrot.lane.b32.xlu0 %v95, 4
    %v145 = vpop.permute.xlu0 %144
    %146 = vrot.lane.b32.xlu0 %v96, 4
    %v147 = vpop.permute.xlu0 %146
    %148 = vrot.lane.b32.xlu0 %v97, 4
    %v149 = vpop.permute.xlu0 %148
    %150 = vrot.lane.b32.xlu0 %v98, 4
    %v151 = vpop.permute.xlu0 %150
    %152 = vrot.lane.b32.xlu0 %v99, 4
    %v153 = vpop.permute.xlu0 %152
    %154 = vrot.lane.b32.xlu0 %v100, 4
    %v155 = vpop.permute.xlu0 %154
    %156 = vrot.lane.b32.xlu0 %v101, 4
    %v157 = vpop.permute.xlu0 %156
    %158 = vrot.lane.b32.xlu0 %v102, 4
    %v159 = vpop.permute.xlu0 %158
    %160 = vrot.lane.b32.xlu0 %v103, 4
    %v161 = vpop.permute.xlu0 %160
    %162 = vrot.lane.b32.xlu0 %v104, 4
    %v163 = vpop.permute.xlu0 %162
    %164 = vrot.lane.b32.xlu0 %v105, 4
    %v165 = vpop.permute.xlu0 %164
    %166 = vrot.lane.b32.xlu0 %v106, 4
    %v167 = vpop.permute.xlu0 %166
    %168 = vrot.lane.b32.xlu0 %v107, 4
    %v169 = vpop.permute.xlu0 %168
    %170 = vrot.lane.b32.xlu0 %v108, 4
    %v171 = vpop.permute.xlu0 %170
    %172 = vrot.lane.b32.xlu0 %v109, 4
    %v173 = vpop.permute.xlu0 %172
    %206 = vrot.lane.b32.xlu0 %v110, 8
    %v207 = vpop.permute.xlu0 %206
    %208 = vrot.lane.b32.xlu0 %v111, 8
    %v209 = vpop.permute.xlu0 %208
    %210 = vrot.lane.b32.xlu0 %v112, 8
    %v211 = vpop.permute.xlu0 %210
    %212 = vrot.lane.b32.xlu0 %v113, 8
    %v213 = vpop.permute.xlu0 %212
    %214 = vrot.lane.b32.xlu0 %v114, 8
    %v215 = vpop.permute.xlu0 %214
    %216 = vrot.lane.b32.xlu0 %v115, 8
    %v217 = vpop.permute.xlu0 %216
    %218 = vrot.lane.b32.xlu0 %v116, 8
    %v219 = vpop.permute.xlu0 %218
    %220 = vrot.lane.b32.xlu0 %v117, 8
    %v221 = vpop.permute.xlu0 %220
    %222 = vrot.lane.b32.xlu0 %v118, 8
    %v223 = vpop.permute.xlu0 %222
    %224 = vrot.lane.b32.xlu0 %v119, 8
    %v225 = vpop.permute.xlu0 %224
    %226 = vrot.lane.b32.xlu0 %v120, 8
    %v227 = vpop.permute.xlu0 %226
    %228 = vrot.lane.b32.xlu0 %v121, 8
    %v229 = vpop.permute.xlu0 %228
    %230 = vrot.lane.b32.xlu0 %v122, 8
    %v231 = vpop.permute.xlu0 %230
    %232 = vrot.lane.b32.xlu0 %v123, 8
    %v233 = vpop.permute.xlu0 %232
    %234 = vrot.lane.b32.xlu0 %v124, 8
    %v235 = vpop.permute.xlu0 %234
    %236 = vrot.lane.b32.xlu0 %v125, 8
    %v237 = vpop.permute.xlu0 %236
    %v254 = vsel %vm61, %v78, %v143
    %v255 = vsel %vm61, %v79, %v145
    %v256 = vsel %vm61, %v80, %v147
    %v257 = vsel %vm61, %v81, %v149
    %v258 = vsel %vm61, %v82, %v151
    %v259 = vsel %vm61, %v83, %v153
    %v260 = vsel %vm61, %v84, %v155
    %v261 = vsel %vm61, %v85, %v157
    %v262 = vsel %vm61, %v86, %v159
    %v263 = vsel %vm61, %v87, %v161
    %v264 = vsel %vm61, %v88, %v163
    %v265 = vsel %vm61, %v89, %v165
    %v266 = vsel %vm61, %v90, %v167
    %v267 = vsel %vm61, %v91, %v169
    %v268 = vsel %vm61, %v92, %v171
    %v269 = vsel %vm61, %v93, %v173
    %vm270 = vcmask 64512
    %v271 = vsel %vm270, %v254, %v207
    %v272 = vsel %vm270, %v255, %v209
    %v273 = vsel %vm270, %v256, %v211
    %v274 = vsel %vm270, %v257, %v213
    %v275 = vsel %vm270, %v258, %v215
    %v276 = vsel %vm270, %v259, %v217
    %v277 = vsel %vm270, %v260, %v219
    %v278 = vsel %vm270, %v261, %v221
    %v279 = vsel %vm270, %v262, %v223
    %v280 = vsel %vm270, %v263, %v225
    %v281 = vsel %vm270, %v264, %v227
    %v282 = vsel %vm270, %v265, %v229
    %v283 = vsel %vm270, %v266, %v231
    %v284 = vsel %vm270, %v267, %v233
    %v285 = vsel %vm270, %v268, %v235
    %v286 = vsel %vm270, %v269, %v237
    %v287 = vld [vmem:[%s1] sm:$0xff]
    %v288 = vld [vmem:[%s1 + $0x8] sm:$0xf]
    %v289 = vld [vmem:[%s2] sm:$0x1]
    %v291 = vlaneseq
    %v292 = vshrl.u32 %v291, 7
    %v293 = vsub.s32 0, %v292
    %v294 = vrot.slane %v289, %v293
    %vm296 = vcmask 97280
    %v298 = vsel %vm296, %v271, 0
    %v301 = vsel %vm296, %v272, 0
    %v304 = vsel %vm296, %v273, 0
    %v307 = vsel %vm296, %v274, 0
    %v310 = vsel %vm296, %v275, 0
    %v313 = vsel %vm296, %v276, 0
    %v316 = vsel %vm296, %v277, 0
    %v319 = vsel %vm296, %v278, 0
    %v322 = vsel %vm296, %v279, 0
    %v325 = vsel %vm296, %v280, 0
    %v328 = vsel %vm296, %v281, 0
    %v331 = vsel %vm296, %v282, 0
    %v334 = vsel %vm296, %v283, 0
    %v337 = vsel %vm296, %v284, 0
    %v340 = vsel %vm296, %v285, 0
    %v343 = vsel %vm296, %v286, 0
    %vm345 = vcmask 1043456
    %v347 = vsel %vm345, %v288, 0
    %349 = vmatprep.subr.mxu0 0.0
    %350 = vmatpush1.msra.mxu0 0.0
    %351 = vmatprep.subr.mxu0 0.0
    %352 = vmatpush1.msra.mxu0 0.0
    %353 = vmatprep.subr.mxu0 0.0
    %354 = vmatpush1.msra.mxu0 0.0
    %355 = vmatprep.subr.mxu0 0.0
    %356 = vmatpush1.msra.mxu0 0.0
    %357 = vmatprep.subr.mxu0 0.0
    %358 = vmatpush1.msra.mxu0 0.0
    %359 = vmatprep.subr.mxu0 0.0
    %360 = vmatpush1.msra.mxu0 0.0
    %361 = vmatprep.subr.mxu0 0.0
    %362 = vmatpush1.msra.mxu0 0.0
    %363 = vmatprep.subr.mxu0 0.0
    %364 = vmatpush1.msra.mxu0 0.0
    %365 = vmatprep.subr.mxu0 0.0
    %366 = vmatpush1.msra.mxu0 0.0
    %367 = vmatprep.subr.mxu0 0.0
    %368 = vmatpush1.msra.mxu0 0.0
    %369 = vmatprep.subr.mxu0 0.0
    %370 = vmatpush1.msra.mxu0 0.0
    %371 = vmatprep.subr.mxu0 0.0
    %372 = vmatpush1.msra.mxu0 0.0
    %373 = vmatprep.subr.mxu0 0.0
    %374 = vmatpush1.msra.mxu0 0.0
    %375 = vmatprep.subr.mxu0 0.0
    %376 = vmatpush1.msra.mxu0 0.0
    %377 = vmatprep.subr.mxu0 0.0
    %378 = vmatpush1.msra.mxu0 %v347
    %379 = vmatprep.subr.mxu0 0.0
    %380 = vmatpush1.msra.mxu0 %v287
    %381 = vmatprep.subr.mxu0 0.0
    %382 = vmatpush2.msra.mxu0 0.0
    %383 = vmatprep.subr.mxu0 0.0
    %384 = vmatpush2.msra.mxu0 0.0
    %385 = vmatprep.subr.mxu0 0.0
    %386 = vmatpush2.msra.mxu0 0.0
    %387 = vmatprep.subr.mxu0 0.0
    %388 = vmatpush2.msra.mxu0 0.0
    %389 = vmatprep.subr.mxu0 0.0
    %390 = vmatpush2.msra.mxu0 0.0
    %391 = vmatprep.subr.mxu0 0.0
    %392 = vmatpush2.msra.mxu0 0.0
    %393 = vmatprep.subr.mxu0 0.0
    %394 = vmatpush2.msra.mxu0 0.0
    %395 = vmatprep.subr.mxu0 0.0
    %396 = vmatpush2.msra.mxu0 0.0
    %397 = vmatprep.subr.mxu0 0.0
    %398 = vmatpush2.msra.mxu0 0.0
    %399 = vmatprep.subr.mxu0 0.0
    %400 = vmatpush2.msra.mxu0 0.0
    %401 = vmatprep.subr.mxu0 0.0
    %402 = vmatpush2.msra.mxu0 0.0
    %403 = vmatprep.subr.mxu0 0.0
    %404 = vmatpush2.msra.mxu0 0.0
    %405 = vmatprep.subr.mxu0 0.0
    %406 = vmatpush2.msra.mxu0 0.0
    %407 = vmatprep.subr.mxu0 0.0
    %408 = vmatpush2.msra.mxu0 0.0
    %409 = vmatprep.subr.mxu0 0.0
    %410 = vmatpush2.msra.mxu0 0.0
    %411 = vmatprep.subr.mxu0 0.0
    %412 = vmatpush2.msra.mxu0 0.0
    %413 = vmatprep.mubr.f32.mxu0 0.0
    %414 = vmatmul.mubr.f32.gmra.mxu0 %v298
    %v415 = vpop.f32.mrf.mxu0
    %v416 = vadd.f32 %v294, %v415
    %v417 = vpop.f32.mrf.mxu0
    %418 = vmatprep.mubr.f32.mxu0 0.0
    %419 = vmatmul.mubr.f32.gmra.mxu0 %v301
    %v420 = vpop.f32.mrf.mxu0
    %v421 = vadd.f32 %v294, %v420
    %v422 = vpop.f32.mrf.mxu0
    %423 = vmatprep.mubr.f32.mxu0 0.0
    %424 = vmatmul.mubr.f32.gmra.mxu0 %v304
    %v425 = vpop.f32.mrf.mxu0
    %v426 = vadd.f32 %v294, %v425
    %v427 = vpop.f32.mrf.mxu0
    %428 = vmatprep.mubr.f32.mxu0 0.0
    %429 = vmatmul.mubr.f32.gmra.mxu0 %v307
    %v430 = vpop.f32.mrf.mxu0
    %v431 = vadd.f32 %v294, %v430
    %v432 = vpop.f32.mrf.mxu0
    %433 = vmatprep.mubr.f32.mxu0 0.0
    %434 = vmatmul.mubr.f32.gmra.mxu0 %v310
    %v435 = vpop.f32.mrf.mxu0
    %v436 = vadd.f32 %v294, %v435
    %v437 = vpop.f32.mrf.mxu0
    %438 = vmatprep.mubr.f32.mxu0 0.0
    %439 = vmatmul.mubr.f32.gmra.mxu0 %v313
    %v440 = vpop.f32.mrf.mxu0
    %v441 = vadd.f32 %v294, %v440
    %v442 = vpop.f32.mrf.mxu0
    %443 = vmatprep.mubr.f32.mxu0 0.0
    %444 = vmatmul.mubr.f32.gmra.mxu0 %v316
    %v445 = vpop.f32.mrf.mxu0
    %v446 = vadd.f32 %v294, %v445
    %v447 = vpop.f32.mrf.mxu0
    %448 = vmatprep.mubr.f32.mxu0 0.0
    %449 = vmatmul.mubr.f32.gmra.mxu0 %v319
    %v450 = vpop.f32.mrf.mxu0
    %v451 = vadd.f32 %v294, %v450
    %v452 = vpop.f32.mrf.mxu0
    %453 = vmatprep.mubr.f32.mxu0 0.0
    %454 = vmatmul.mubr.f32.gmra.mxu0 %v322
    %v455 = vpop.f32.mrf.mxu0
    %v456 = vadd.f32 %v294, %v455
    %v457 = vpop.f32.mrf.mxu0
    %458 = vmatprep.mubr.f32.mxu0 0.0
    %459 = vmatmul.mubr.f32.gmra.mxu0 %v325
    %v460 = vpop.f32.mrf.mxu0
    %v461 = vadd.f32 %v294, %v460
    %v462 = vpop.f32.mrf.mxu0
    %463 = vmatprep.mubr.f32.mxu0 0.0
    %464 = vmatmul.mubr.f32.gmra.mxu0 %v328
    %v465 = vpop.f32.mrf.mxu0
    %v466 = vadd.f32 %v294, %v465
    %v467 = vpop.f32.mrf.mxu0
    %468 = vmatprep.mubr.f32.mxu0 0.0
    %469 = vmatmul.mubr.f32.gmra.mxu0 %v331
    %v470 = vpop.f32.mrf.mxu0
    %v471 = vadd.f32 %v294, %v470
    %v472 = vpop.f32.mrf.mxu0
    %473 = vmatprep.mubr.f32.mxu0 0.0
    %474 = vmatmul.mubr.f32.gmra.mxu0 %v334
    %v475 = vpop.f32.mrf.mxu0
    %v476 = vadd.f32 %v294, %v475
    %v477 = vpop.f32.mrf.mxu0
    %478 = vmatprep.mubr.f32.mxu0 0.0
    %479 = vmatmul.mubr.f32.gmra.mxu0 %v337
    %v480 = vpop.f32.mrf.mxu0
    %v481 = vadd.f32 %v294, %v480
    %v482 = vpop.f32.mrf.mxu0
    %483 = vmatprep.mubr.f32.mxu0 0.0
    %484 = vmatmul.mubr.f32.gmra.mxu0 %v340
    %v485 = vpop.f32.mrf.mxu0
    %v486 = vadd.f32 %v294, %v485
    %v487 = vpop.f32.mrf.mxu0
    %488 = vmatprep.mubr.f32.mxu0 0.0
    %489 = vmatmul.mubr.f32.gmra.mxu0 %v343
    %v490 = vpop.f32.mrf.mxu0
    %v491 = vadd.f32 %v294, %v490
    %v492 = vpop.f32.mrf.mxu0
    %493 = vdwg.mxu0
    %v494 = vmax.f32 %v416, 0.0
    %v495 = vmax.f32 %v421, 0.0
    %v496 = vmax.f32 %v426, 0.0
    %v497 = vmax.f32 %v431, 0.0
    %v498 = vmax.f32 %v436, 0.0
    %v499 = vmax.f32 %v441, 0.0
    %v500 = vmax.f32 %v446, 0.0
    %v501 = vmax.f32 %v451, 0.0
    %v502 = vmax.f32 %v456, 0.0
    %v503 = vmax.f32 %v461, 0.0
    %v504 = vmax.f32 %v466, 0.0
    %v505 = vmax.f32 %v471, 0.0
    %v506 = vmax.f32 %v476, 0.0
    %v507 = vmax.f32 %v481, 0.0
    %v508 = vmax.f32 %v486, 0.0
    %v509 = vmax.f32 %v491, 0.0
    %v510 = vmax.f32 %v494, %v495
    %v511 = vrot.slane %v510, 4
    %v512 = vmax.f32 %v510, %v511
    %v513 = vrot.slane %v512, 2
    %v514 = vmax.f32 %v512, %v513
    %v515 = vrot.slane %v514, 1
    %v516 = vmax.f32 %v514, %v515
    %v517 = vmax.f32 %v496, %v497
    %v518 = vrot.slane %v517, 4
    %v519 = vmax.f32 %v517, %v518
    %v520 = vrot.slane %v519, 2
    %v521 = vmax.f32 %v519, %v520
    %v522 = vrot.slane %v521, 1
    %v523 = vmax.f32 %v521, %v522
    %v524 = vmax.f32 %v498, %v499
    %v525 = vrot.slane %v524, 4
    %v526 = vmax.f32 %v524, %v525
    %v527 = vrot.slane %v526, 2
    %v528 = vmax.f32 %v526, %v527
    %v529 = vrot.slane %v528, 1
    %v530 = vmax.f32 %v528, %v529
    %v531 = vmax.f32 %v500, %v501
    %v532 = vrot.slane %v531, 4
    %v533 = vmax.f32 %v531, %v532
    %v534 = vrot.slane %v533, 2
    %v535 = vmax.f32 %v533, %v534
    %v536 = vrot.slane %v535, 1
    %v537 = vmax.f32 %v535, %v536
    %v538 = vmax.f32 %v502, %v503
    %v539 = vrot.slane %v538, 4
    %v540 = vmax.f32 %v538, %v539
    %v541 = vrot.slane %v540, 2
    %v542 = vmax.f32 %v540, %v541
    %v543 = vrot.slane %v542, 1
    %v544 = vmax.f32 %v542, %v543
    %v545 = vmax.f32 %v504, %v505
    %v546 = vrot.slane %v545, 4
    %v547 = vmax.f32 %v545, %v546
    %v548 = vrot.slane %v547, 2
    %v549 = vmax.f32 %v547, %v548
    %v550 = vrot.slane %v549, 1
    %v551 = vmax.f32 %v549, %v550
    %v552 = vmax.f32 %v506, %v507
    %v553 = vrot.slane %v552, 4
    %v554 = vmax.f32 %v552, %v553
    %v555 = vrot.slane %v554, 2
    %v556 = vmax.f32 %v554, %v555
    %v557 = vrot.slane %v556, 1
    %v558 = vmax.f32 %v556, %v557
    %v559 = vmax.f32 %v508, %v509
    %v560 = vrot.slane %v559, 4
    %v561 = vmax.f32 %v559, %v560
    %v562 = vrot.slane %v561, 2
    %v563 = vmax.f32 %v561, %v562
    %v564 = vrot.slane %v563, 1
    %v565 = vmax.f32 %v563, %v564
    %vm574 = vcmask 1041409
    %v575 = vsel %vm574, %v523, %v516
    %vm576 = vcmask 1042434
    %v577 = vsel %vm576, %v530, %v575
    %vm578 = vcmask 1043459
    %v579 = vsel %vm578, %v537, %v577
    %vm580 = vcmask 1044484
    %v581 = vsel %vm580, %v544, %v579
    %vm582 = vcmask 1045509
    %v583 = vsel %vm582, %v551, %v581
    %vm584 = vcmask 1046534
    %v585 = vsel %vm584, %v558, %v583
    %vm586 = vcmask 1047559
    %v587 = vsel %vm586, %v565, %v585
    %589 = vst [vmem:[#allocation3] sm:$0xff] %v587
    // Predicated region
    $region18: #{tpu_custom_call.1} parent=1 // pred_check
      _
    $region19: #{tpu_custom_call.1} parent=1 // pred_check_branch
      %591 = sbr.rel (0) target = $region21
    $region20: #{tpu_custom_call.1} parent=1 // pred_region
      %s593 = ssub.s32 128, 128
      %594 = vsyncadd [#allocation4], %s593
      %s596 = sshll.u32 [#allocation3], 4
      %s597 = int_to_ptr.vmem [resolvable:$true] %s596
      %599 = dma.vmem_to_hbm [thread:$0]  %s597, 128, %s3, [#allocation4]
    $region21: #{tpu_custom_call.1} parent=1 // pred_fallthru
      _
    // Predicated region
    $region22: #{tpu_custom_call.1} parent=1 // pred_check
      _
    $region23: #{tpu_custom_call.1} parent=1 // pred_check_branch
      %601 = sbr.rel (0) target = $region25
    $region24: #{tpu_custom_call.1} parent=1 // pred_region
      %602 = dma.done [#allocation4], 128
    $region25: #{tpu_custom_call.1} parent=1 // pred_fallthru
      _
    %603 = vsyncpa [#allocation4], 1

</llo_original>
